<compile_context>
chip_gen: v7x
topology: tpu7x:2x2x1
jax: 0.10.0
libtpu: 0.0.40
codegen_flags: <defaults>
</compile_context>

<pallas_src>
import functools

import jax
import jax.numpy as jnp
from jax.experimental import pallas as pl
from jax.experimental.pallas import tpu as pltpu

_LANES = 128
_SUBLANES = 8


def _round_up(a: int, b: int) -> int:
    return (a + b - 1) // b * b


def _bce_dice_kernel(x_ref, t_ref, bce_ref, inter_ref, pt_ref, *,
                     rows: int, tiles_per_core: int):
    """Accumulate per-sample BCE / intersection / (p + t) partial sums.

    x_ref, t_ref : (N, TR, 128) blocks of logits / targets (caller dtype).
    bce_ref, inter_ref, pt_ref : (N, 8, 128) f32 output blocks, one block per
    parallel grid index; the same block is revisited across the reduction axis.
    """
    i = pl.program_id(0)            # "parallel" axis (megacore split on v7x)
    k = pl.program_id(1)            # reduction axis over row tiles

    @pl.when(k == 0)
    def _init():
        bce_ref[...] = jnp.zeros_like(bce_ref)
        inter_ref[...] = jnp.zeros_like(inter_ref)
        pt_ref[...] = jnp.zeros_like(pt_ref)

    n_s, tr, lanes = x_ref.shape
    g = tr // _SUBLANES

    x = x_ref[...].astype(jnp.float32)       # in-kernel upcast (cheap VPU op)
    t = t_ref[...].astype(jnp.float32)

    # Stable BCE-with-logits; exp(-|x|) is computed once and reused for the
    # sigmoid, so the EUP sees 2 transcendentals + 1 divide per element.
    e = jnp.exp(-jnp.abs(x))
    bce_e = jnp.maximum(x, 0.0) - x * t + jnp.log1p(e)
    p = jnp.where(x >= 0.0, 1.0, e) / (1.0 + e)          # exact sigmoid(x)

    def _accumulate(bce_v, p_v, t_v):
        # Vreg-chunked partial sums: only VPU adds in the hot loop.  The
        # sublane split (TR -> g, 8) matches the (8, 128) tiling, so the
        # reshape is a view and no cross-lane (XLU) work happens here.
        bce_ref[...] += bce_v.reshape(n_s, g, _SUBLANES, lanes).sum(axis=1)
        inter_ref[...] += (p_v * t_v).reshape(n_s, g, _SUBLANES, lanes).sum(axis=1)
        pt_ref[...] += (p_v + t_v).reshape(n_s, g, _SUBLANES, lanes).sum(axis=1)

    tile_global = i * tiles_per_core + k
    row0 = tile_global * tr
    is_edge = row0 + tr > rows      # partial / fully padded (clamped) tile

    @pl.when(jnp.logical_not(is_edge))
    def _full_tile():
        _accumulate(bce_e, p, t)

    @pl.when(is_edge)
    def _edge_tile():
        local_row = jax.lax.broadcasted_iota(jnp.int32, (n_s, tr, lanes), 1)
        valid = (local_row + row0) < rows
        zero = jnp.zeros_like(p)
        _accumulate(jnp.where(valid, bce_e, zero),
                    jnp.where(valid, p, zero),
                    jnp.where(valid, t, zero))


def bce_dice_loss(logits, target, alpha=0.5, smooth=1e-5, max_rows_per_tile=None):
    """alpha * BCEWithLogits(mean) + (1 - alpha) * DiceLoss, NCHW-style inputs."""
    n = logits.shape[0]
    x2 = logits.reshape(n, -1)          # metadata-only reshape (no HBM copy)
    t2 = target.reshape(n, -1)
    d = x2.shape[1]

    # Rare fallback: pad the flattened axis to a lane multiple so the (N,R,128)
    # reshape stays free in the common case.  Pad values contribute exactly
    # zero to every accumulated sum (logit=-1e4 -> sigmoid/BCE underflow to 0).
    if d % _LANES != 0:
        pad = _LANES - d % _LANES
        x2 = jnp.pad(x2, ((0, 0), (0, pad)), constant_values=-1e4)
        t2 = jnp.pad(t2, ((0, 0), (0, pad)), constant_values=0)
    r = x2.shape[1] // _LANES
    x3 = x2.reshape(n, r, _LANES)
    t3 = t2.reshape(n, r, _LANES)

    # ---- tile sizing, gated on the actual chip's VMEM capacity --------------
    try:
        vmem_cap = int(pltpu.get_tpu_info().vmem_capacity_bytes)
    except Exception:
        vmem_cap = 64 * 1024 * 1024                 # conservative (v7x per-core)
    budget = min(vmem_cap // 4, 32 * 1024 * 1024)   # double-buffered input bytes
    xb = x3.dtype.itemsize
    tb = t3.dtype.itemsize
    # Row alignment: 8 sublanes for 32-bit inputs, 16 if anything is sub-32-bit.
    row_align = _SUBLANES if min(xb, tb) >= 4 else 2 * _SUBLANES
    bytes_per_row = n * _LANES * (xb + tb) * 2      # both inputs, 2 pipeline bufs
    tr_budget = max(row_align, (budget // bytes_per_row) // row_align * row_align)
    tr = min(_round_up(r, row_align), 4096, tr_budget)
    if max_rows_per_tile is not None:
        tr = min(tr, max(row_align, _round_up(max_rows_per_tile, row_align)))
    tr = int(tr)

    total_tiles = int(pl.cdiv(r, tr))
    n_par = 2 if total_tiles >= 2 else 1            # feed both TCs on megacore
    num_k = int(pl.cdiv(total_tiles, n_par))

    def in_map(i, k):
        # Clamp so padded grid steps re-read a valid tile; the kernel masks
        # their contribution to exactly zero.
        return (0, jnp.minimum(i * num_k + k, total_tiles - 1), 0)

    def out_map(i, k):
        return (i, 0, 0)

    acc_shape = (n_par * n, _SUBLANES, _LANES)
    acc_spec = pl.BlockSpec((n, _SUBLANES, _LANES), out_map)
    kernel = functools.partial(_bce_dice_kernel, rows=r, tiles_per_core=num_k)

    in_block_bytes = n * tr * _LANES * (xb + tb)
    out_bytes = 3 * n * _SUBLANES * _LANES * 4
    vmem_limit = int(min(max(2 * in_block_bytes + 2 * out_bytes + (4 << 20),
                             16 << 20),
                         vmem_cap * 3 // 4))

    bce_p, inter_p, pt_p = pl.pallas_call(
        kernel,
        out_shape=(
            jax.ShapeDtypeStruct(acc_shape, jnp.float32),
            jax.ShapeDtypeStruct(acc_shape, jnp.float32),
            jax.ShapeDtypeStruct(acc_shape, jnp.float32),
        ),
        grid_spec=pltpu.PrefetchScalarGridSpec(
            num_scalar_prefetch=0,
            grid=(n_par, num_k),
            in_specs=[
                pl.BlockSpec((n, tr, _LANES), in_map),
                pl.BlockSpec((n, tr, _LANES), in_map),
            ],
            out_specs=(acc_spec, acc_spec, acc_spec),
        ),
        compiler_params=pltpu.CompilerParams(
            dimension_semantics=("parallel", "arbitrary"),
            vmem_limit_bytes=vmem_limit,
        ),
    )(x3, t3)

    # Tiny wrapper-side combine (a few KiB): cross-core + cross-vreg sums,
    # the dice ratio, and the final blend.
    bce = bce_p.sum() / (n * d)                       # mean over TRUE count
    inter = inter_p.reshape(n_par, n, -1).sum(axis=(0, 2))
    pt = pt_p.reshape(n_par, n, -1).sum(axis=(0, 2))
    dice = (2.0 * inter + smooth) / (pt + smooth)
    dice_loss = 1.0 - jnp.mean(dice)
    return alpha * bce + (1.0 - alpha) * dice_loss


if __name__ == "__main__":
    key = jax.random.PRNGKey(0)
    k1, k2 = jax.random.split(key)

    def reference(x, t, alpha=0.5, smooth=1e-5):
        xf = x.astype(jnp.float32)
        tf = t.astype(jnp.float32)
        bce = jnp.mean(jnp.maximum(xf, 0.0) - xf * tf
                       + jnp.log1p(jnp.exp(-jnp.abs(xf))))
        num = x.shape[0]
        p = jax.nn.sigmoid(xf).reshape(num, -1)
        tt = tf.reshape(num, -1)
        dice = (2.0 * jnp.sum(p * tt, axis=1) + smooth) / (
            jnp.sum(p, axis=1) + jnp.sum(tt, axis=1) + smooth)
        return alpha * bce + (1.0 - alpha) * (1.0 - jnp.mean(dice))

    # Segmentation-style shapes: (N, C, H, W) logits + binary mask.
    x = jax.random.normal(k1, (2, 4, 16, 16), dtype=jnp.float32)
    t = (jax.random.uniform(k2, (2, 4, 16, 16)) > 0.5).astype(jnp.float32)
    loss = bce_dice_loss(x, t, alpha=0.5)
    jax.block_until_ready(loss)
    ref = reference(x, t, alpha=0.5)
    assert jnp.allclose(loss, ref, rtol=1e-5, atol=1e-5), (loss, ref)

    # Larger case forced onto multiple row tiles so the two-slice "parallel"
    # split, the clamped index_map and the masked edge tile are all exercised.
    k3, k4 = jax.random.split(k1)
    x2 = jax.random.normal(k3, (2, 4, 56, 56), dtype=jnp.float32)
    t2 = (jax.random.uniform(k4, (2, 4, 56, 56)) > 0.5).astype(jnp.float32)
    loss2 = bce_dice_loss(x2, t2, alpha=0.3, max_rows_per_tile=16)
    jax.block_until_ready(loss2)
    ref2 = reference(x2, t2, alpha=0.3)
    assert jnp.allclose(loss2, ref2, rtol=1e-5, atol=1e-5), (loss2, ref2)

    print("KERNEL_OK")
</pallas_src>

<mosaic_0001>
module attributes {stable_mosaic.version = 11 : i64} {
  func.func @_bce_dice_kernel(%arg0: i32, %arg1: i32, %arg2: memref<2x8x128xf32, #tpu.memory_space<vmem>>, %arg3: memref<2x8x128xf32, #tpu.memory_space<vmem>>, %arg4: memref<2x8x128xf32, #tpu.memory_space<vmem>>, %arg5: memref<2x8x128xf32, #tpu.memory_space<vmem>>, %arg6: memref<2x8x128xf32, #tpu.memory_space<vmem>>) attributes {dimension_semantics = [#tpu.dimension_semantics<parallel>, #tpu.dimension_semantics<arbitrary>], iteration_bounds = array<i64: 1, 1>, scalar_prefetch = 0 : i64, scratch_operands = 0 : i64, tpu.core_type = #tpu.core_type<tc>, window_params = [{transform_indices = @transform_0, window_bounds = array<i64: 2, 8, 128>}, {transform_indices = @transform_1, window_bounds = array<i64: 2, 8, 128>}, {transform_indices = @transform_2, window_bounds = array<i64: 2, 8, 128>}, {transform_indices = @transform_3, window_bounds = array<i64: 2, 8, 128>}, {transform_indices = @transform_4, window_bounds = array<i64: 2, 8, 128>}]} {
    %c0_i32 = arith.constant 0 : i32
    %0 = arith.cmpi eq, %arg1, %c0_i32 : i32
    %1 = arith.extui %0 : i1 to i32
    %c0_i32_0 = arith.constant 0 : i32
    %2 = arith.cmpi ne, %1, %c0_i32_0 : i32
    scf.if %2 {
      %cst_14 = arith.constant 0.000000e+00 : f32
      %32 = vector.broadcast %cst_14 : f32 to vector<2x8x128xf32>
      %c0_15 = arith.constant 0 : index
      %c0_16 = arith.constant 0 : index
      %c0_17 = arith.constant 0 : index
      %33 = vector.load %arg4[%c0_15, %c0_16, %c0_17] : memref<2x8x128xf32, #tpu.memory_space<vmem>>, vector<2x8x128xf32>
      tpu.vector_store %arg4[%c0_15, %c0_16, %c0_17], %32 {strides = array<i32>} : memref<2x8x128xf32, #tpu.memory_space<vmem>>, vector<2x8x128xf32>,
      %cst_18 = arith.constant 0.000000e+00 : f32
      %34 = vector.broadcast %cst_18 : f32 to vector<2x8x128xf32>
      %c0_19 = arith.constant 0 : index
      %c0_20 = arith.constant 0 : index
      %c0_21 = arith.constant 0 : index
      %35 = vector.load %arg5[%c0_19, %c0_20, %c0_21] : memref<2x8x128xf32, #tpu.memory_space<vmem>>, vector<2x8x128xf32>
      tpu.vector_store %arg5[%c0_19, %c0_20, %c0_21], %34 {strides = array<i32>} : memref<2x8x128xf32, #tpu.memory_space<vmem>>, vector<2x8x128xf32>,
      %cst_22 = arith.constant 0.000000e+00 : f32
      %36 = vector.broadcast %cst_22 : f32 to vector<2x8x128xf32>
      %c0_23 = arith.constant 0 : index
      %c0_24 = arith.constant 0 : index
      %c0_25 = arith.constant 0 : index
      %37 = vector.load %arg6[%c0_23, %c0_24, %c0_25] : memref<2x8x128xf32, #tpu.memory_space<vmem>>, vector<2x8x128xf32>
      tpu.vector_store %arg6[%c0_23, %c0_24, %c0_25], %36 {strides = array<i32>} : memref<2x8x128xf32, #tpu.memory_space<vmem>>, vector<2x8x128xf32>,
    } else {
    }
    %c0 = arith.constant 0 : index
    %c0_1 = arith.constant 0 : index
    %c0_2 = arith.constant 0 : index
    %3 = vector.load %arg2[%c0, %c0_1, %c0_2] : memref<2x8x128xf32, #tpu.memory_space<vmem>>, vector<2x8x128xf32>
    %c0_3 = arith.constant 0 : index
    %c0_4 = arith.constant 0 : index
    %c0_5 = arith.constant 0 : index
    %4 = vector.load %arg3[%c0_3, %c0_4, %c0_5] : memref<2x8x128xf32, #tpu.memory_space<vmem>>, vector<2x8x128xf32>
    %5 = math.absf %3 : vector<2x8x128xf32>
    %cst = arith.constant 0.000000e+00 : f32
    %6 = vector.broadcast %cst : f32 to vector<2x8x128xf32>
    %7 = arith.subf %6, %5 : vector<2x8x128xf32>
    %8 = math.exp %7 : vector<2x8x128xf32>
    %cst_6 = arith.constant 0.000000e+00 : f32
    %9 = vector.broadcast %cst_6 : f32 to vector<2x8x128xf32>
    %10 = arith.maximumf %3, %9 : vector<2x8x128xf32>
    %11 = arith.mulf %3, %4 : vector<2x8x128xf32>
    %12 = arith.subf %10, %11 : vector<2x8x128xf32>
    %13 = math.log1p %8 : vector<2x8x128xf32>
    %14 = arith.addf %12, %13 : vector<2x8x128xf32>
    %cst_7 = arith.constant 0.000000e+00 : f32
    %15 = vector.broadcast %cst_7 : f32 to vector<2x8x128xf32>
    %16 = arith.cmpf oge, %3, %15 : vector<2x8x128xf32>
    %cst_8 = arith.constant 1.000000e+00 : f32
    %17 = vector.broadcast %cst_8 : f32 to vector<2x8x128xf32>
    %18 = arith.select %16, %17, %8 : vector<2x8x128xi1>, vector<2x8x128xf32>
    %cst_9 = arith.constant 1.000000e+00 : f32
    %19 = vector.broadcast %cst_9 : f32 to vector<2x8x128xf32>
    %20 = arith.addf %19, %8 : vector<2x8x128xf32>
    %21 = arith.divf %18, %20 : vector<2x8x128xf32>
    %c1_i32 = arith.constant 1 : i32
    %22 = arith.muli %arg0, %c1_i32 : i32
    %23 = arith.addi %22, %arg1 : i32
    %c8_i32 = arith.constant 8 : i32
    %24 = arith.muli %23, %c8_i32 : i32
    %c8_i32_10 = arith.constant 8 : i32
    %25 = arith.addi %24, %c8_i32_10 : i32
    %c8_i32_11 = arith.constant 8 : i32
    %26 = arith.cmpi sgt, %25, %c8_i32_11 : i32
    %true = arith.constant true
    %27 = arith.xori %26, %true : i1
    %28 = arith.extui %27 : i1 to i32
    %c0_i32_12 = arith.constant 0 : i32
    %29 = arith.cmpi ne, %28, %c0_i32_12 : i32
    scf.if %29 {
      %c0_14 = arith.constant 0 : index
      %c0_15 = arith.constant 0 : index
      %c0_16 = arith.constant 0 : index
      %32 = vector.load %arg4[%c0_14, %c0_15, %c0_16] : memref<2x8x128xf32, #tpu.memory_space<vmem>>, vector<2x8x128xf32>
      %33 = vector.shape_cast %14 : vector<2x8x128xf32> to vector<2x1x8x128xf32>
      %cst_17 = arith.constant dense<0.000000e+00> : vector<2x8x128xf32>
      %34 = vector.multi_reduction <add>, %33, %cst_17 [1] : vector<2x1x8x128xf32> to vector<2x8x128xf32>
      %35 = arith.addf %32, %34 : vector<2x8x128xf32>
      %c0_18 = arith.constant 0 : index
      %c0_19 = arith.constant 0 : index
      %c0_20 = arith.constant 0 : index
      %36 = vector.load %arg4[%c0_18, %c0_19, %c0_20] : memref<2x8x128xf32, #tpu.memory_space<vmem>>, vector<2x8x128xf32>
      tpu.vector_store %arg4[%c0_18, %c0_19, %c0_20], %35 {strides = array<i32>} : memref<2x8x128xf32, #tpu.memory_space<vmem>>, vector<2x8x128xf32>,
      %c0_21 = arith.constant 0 : index
      %c0_22 = arith.constant 0 : index
      %c0_23 = arith.constant 0 : index
      %37 = vector.load %arg5[%c0_21, %c0_22, %c0_23] : memref<2x8x128xf32, #tpu.memory_space<vmem>>, vector<2x8x128xf32>
      %38 = arith.mulf %21, %4 : vector<2x8x128xf32>
      %39 = vector.shape_cast %38 : vector<2x8x128xf32> to vector<2x1x8x128xf32>
      %cst_24 = arith.constant dense<0.000000e+00> : vector<2x8x128xf32>
      %40 = vector.multi_reduction <add>, %39, %cst_24 [1] : vector<2x1x8x128xf32> to vector<2x8x128xf32>
      %41 = arith.addf %37, %40 : vector<2x8x128xf32>
      %c0_25 = arith.constant 0 : index
      %c0_26 = arith.constant 0 : index
      %c0_27 = arith.constant 0 : index
      %42 = vector.load %arg5[%c0_25, %c0_26, %c0_27] : memref<2x8x128xf32, #tpu.memory_space<vmem>>, vector<2x8x128xf32>
      tpu.vector_store %arg5[%c0_25, %c0_26, %c0_27], %41 {strides = array<i32>} : memref<2x8x128xf32, #tpu.memory_space<vmem>>, vector<2x8x128xf32>,
      %c0_28 = arith.constant 0 : index
      %c0_29 = arith.constant 0 : index
      %c0_30 = arith.constant 0 : index
      %43 = vector.load %arg6[%c0_28, %c0_29, %c0_30] : memref<2x8x128xf32, #tpu.memory_space<vmem>>, vector<2x8x128xf32>
      %44 = arith.addf %21, %4 : vector<2x8x128xf32>
      %45 = vector.shape_cast %44 : vector<2x8x128xf32> to vector<2x1x8x128xf32>
      %cst_31 = arith.constant dense<0.000000e+00> : vector<2x8x128xf32>
      %46 = vector.multi_reduction <add>, %45, %cst_31 [1] : vector<2x1x8x128xf32> to vector<2x8x128xf32>
      %47 = arith.addf %43, %46 : vector<2x8x128xf32>
      %c0_32 = arith.constant 0 : index
      %c0_33 = arith.constant 0 : index
      %c0_34 = arith.constant 0 : index
      %48 = vector.load %arg6[%c0_32, %c0_33, %c0_34] : memref<2x8x128xf32, #tpu.memory_space<vmem>>, vector<2x8x128xf32>
      tpu.vector_store %arg6[%c0_32, %c0_33, %c0_34], %47 {strides = array<i32>} : memref<2x8x128xf32, #tpu.memory_space<vmem>>, vector<2x8x128xf32>,
    } else {
    }
    %30 = arith.extui %26 : i1 to i32
    %c0_i32_13 = arith.constant 0 : i32
    %31 = arith.cmpi ne, %30, %c0_i32_13 : i32
    scf.if %31 {
      %32 = tpu.iota {dimensions = array<i32: 1>} : vector<2x8x128xi32>
      %33 = vector.broadcast %24 : i32 to vector<2x8x128xi32>
      %34 = arith.addi %32, %33 : vector<2x8x128xi32>
      %c8_i32_14 = arith.constant 8 : i32
      %35 = vector.broadcast %c8_i32_14 : i32 to vector<2x8x128xi32>
      %36 = arith.cmpi slt, %34, %35 : vector<2x8x128xi32>
      %cst_15 = arith.constant 0.000000e+00 : f32
      %37 = vector.broadcast %cst_15 : f32 to vector<2x8x128xf32>
      %38 = arith.select %36, %14, %37 : vector<2x8x128xi1>, vector<2x8x128xf32>
      %39 = arith.select %36, %21, %37 : vector<2x8x128xi1>, vector<2x8x128xf32>
      %40 = arith.select %36, %4, %37 : vector<2x8x128xi1>, vector<2x8x128xf32>
      %c0_16 = arith.constant 0 : index
      %c0_17 = arith.constant 0 : index
      %c0_18 = arith.constant 0 : index
      %41 = vector.load %arg4[%c0_16, %c0_17, %c0_18] : memref<2x8x128xf32, #tpu.memory_space<vmem>>, vector<2x8x128xf32>
      %42 = vector.shape_cast %38 : vector<2x8x128xf32> to vector<2x1x8x128xf32>
      %cst_19 = arith.constant dense<0.000000e+00> : vector<2x8x128xf32>
      %43 = vector.multi_reduction <add>, %42, %cst_19 [1] : vector<2x1x8x128xf32> to vector<2x8x128xf32>
      %44 = arith.addf %41, %43 : vector<2x8x128xf32>
      %c0_20 = arith.constant 0 : index
      %c0_21 = arith.constant 0 : index
      %c0_22 = arith.constant 0 : index
      %45 = vector.load %arg4[%c0_20, %c0_21, %c0_22] : memref<2x8x128xf32, #tpu.memory_space<vmem>>, vector<2x8x128xf32>
      tpu.vector_store %arg4[%c0_20, %c0_21, %c0_22], %44 {strides = array<i32>} : memref<2x8x128xf32, #tpu.memory_space<vmem>>, vector<2x8x128xf32>,
      %c0_23 = arith.constant 0 : index
      %c0_24 = arith.constant 0 : index
      %c0_25 = arith.constant 0 : index
      %46 = vector.load %arg5[%c0_23, %c0_24, %c0_25] : memref<2x8x128xf32, #tpu.memory_space<vmem>>, vector<2x8x128xf32>
      %47 = arith.mulf %39, %40 : vector<2x8x128xf32>
      %48 = vector.shape_cast %47 : vector<2x8x128xf32> to vector<2x1x8x128xf32>
      %cst_26 = arith.constant dense<0.000000e+00> : vector<2x8x128xf32>
      %49 = vector.multi_reduction <add>, %48, %cst_26 [1] : vector<2x1x8x128xf32> to vector<2x8x128xf32>
      %50 = arith.addf %46, %49 : vector<2x8x128xf32>
      %c0_27 = arith.constant 0 : index
      %c0_28 = arith.constant 0 : index
      %c0_29 = arith.constant 0 : index
      %51 = vector.load %arg5[%c0_27, %c0_28, %c0_29] : memref<2x8x128xf32, #tpu.memory_space<vmem>>, vector<2x8x128xf32>
      tpu.vector_store %arg5[%c0_27, %c0_28, %c0_29], %50 {strides = array<i32>} : memref<2x8x128xf32, #tpu.memory_space<vmem>>, vector<2x8x128xf32>,
      %c0_30 = arith.constant 0 : index
      %c0_31 = arith.constant 0 : index
      %c0_32 = arith.constant 0 : index
      %52 = vector.load %arg6[%c0_30, %c0_31, %c0_32] : memref<2x8x128xf32, #tpu.memory_space<vmem>>, vector<2x8x128xf32>
      %53 = arith.addf %39, %40 : vector<2x8x128xf32>
      %54 = vector.shape_cast %53 : vector<2x8x128xf32> to vector<2x1x8x128xf32>
      %cst_33 = arith.constant dense<0.000000e+00> : vector<2x8x128xf32>
      %55 = vector.multi_reduction <add>, %54, %cst_33 [1] : vector<2x1x8x128xf32> to vector<2x8x128xf32>
      %56 = arith.addf %52, %55 : vector<2x8x128xf32>
      %c0_34 = arith.constant 0 : index
      %c0_35 = arith.constant 0 : index
      %c0_36 = arith.constant 0 : index
      %57 = vector.load %arg6[%c0_34, %c0_35, %c0_36] : memref<2x8x128xf32, #tpu.memory_space<vmem>>, vector<2x8x128xf32>
      tpu.vector_store %arg6[%c0_34, %c0_35, %c0_36], %56 {strides = array<i32>} : memref<2x8x128xf32, #tpu.memory_space<vmem>>, vector<2x8x128xf32>,
    } else {
    }
    return
  }
  func.func @transform_0(%arg0: i32, %arg1: i32) -> (i32, i32, i32) {
    %c1_i32 = arith.constant 1 : i32
    %0 = arith.muli %arg0, %c1_i32 : i32
    %1 = arith.addi %0, %arg1 : i32
    %c0_i32 = arith.constant 0 : i32
    %2 = arith.minsi %1, %c0_i32 : i32
    %c0_i32_0 = arith.constant 0 : i32
    %c0_i32_1 = arith.constant 0 : i32
    %c0_i32_2 = arith.constant 0 : i32
    return %c0_i32_0, %2, %c0_i32_1 : i32, i32, i32
  }
  func.func @transform_1(%arg0: i32, %arg1: i32) -> (i32, i32, i32) {
    %c1_i32 = arith.constant 1 : i32
    %0 = arith.muli %arg0, %c1_i32 : i32
    %1 = arith.addi %0, %arg1 : i32
    %c0_i32 = arith.constant 0 : i32
    %2 = arith.minsi %1, %c0_i32 : i32
    %c0_i32_0 = arith.constant 0 : i32
    %c0_i32_1 = arith.constant 0 : i32
    %c0_i32_2 = arith.constant 0 : i32
    return %c0_i32_0, %2, %c0_i32_1 : i32, i32, i32
  }
  func.func @transform_2(%arg0: i32, %arg1: i32) -> (i32, i32, i32) {
    %c0_i32 = arith.constant 0 : i32
    %c0_i32_0 = arith.constant 0 : i32
    %c0_i32_1 = arith.constant 0 : i32
    return %arg0, %c0_i32, %c0_i32_0 : i32, i32, i32
  }
  func.func @transform_3(%arg0: i32, %arg1: i32) -> (i32, i32, i32) {
    %c0_i32 = arith.constant 0 : i32
    %c0_i32_0 = arith.constant 0 : i32
    %c0_i32_1 = arith.constant 0 : i32
    return %arg0, %c0_i32, %c0_i32_0 : i32, i32, i32
  }
  func.func @transform_4(%arg0: i32, %arg1: i32) -> (i32, i32, i32) {
    %c0_i32 = arith.constant 0 : i32
    %c0_i32_0 = arith.constant 0 : i32
    %c0_i32_1 = arith.constant 0 : i32
    return %arg0, %c0_i32, %c0_i32_0 : i32, i32, i32
  }
}

</mosaic_0001>

<llo_original>
// kernel: tpu_custom_call.1
$region0: #{tpu_custom_call.1}
  #allocation0 [shape = 'u32[]', space=smem, size = 0x4, offset = 0x4, fixed_abs, tag = 'smem constant byte address 0x4 - core index']
  #allocation1 [shape = 'u32[144,128]{1,0:T(1,128)}', space=vmem, size = 0x12000, scoped, tag = 'internal scratch']
  %s0 = inlined_call_operand.hbm [shape: f32[2,8,128], index: 0, kind: input, shape index: {}]
  %s1 = inlined_call_operand.hbm [shape: f32[2,8,128], index: 1, kind: input, shape index: {}]
  %s2 = inlined_call_operand.hbm [shape: f32[2,8,128], index: 2, kind: output, shape index: {0}]
  %s3 = inlined_call_operand.hbm [shape: f32[2,8,128], index: 3, kind: output, shape index: {1}]
  %s4 = inlined_call_operand.hbm [shape: f32[2,8,128], index: 4, kind: output, shape index: {2}]
  %5 = xla_tuple %s2, %s3, %s4
  %s6 = sld [smem:[#allocation0]]
  $region54: #{tpu_custom_call.1} parent=0
    _
  %s8 = ssub.s32 1, %s6
  %s9 = scalar_select 0, %s8, %s6
  $region1: #{tpu_custom_call.1} parent=0
    #allocation2 [shape = 'u8[8192]{0}', space=vmem, size = 0x2000, scoped, tag = 'input window, operand 0, single buffered']
    #allocation3 [shape = 's32[1]{0}', space=sflag, size = 0x4, scoped, tag = 'scoped memory for tpu_custom_call.1']
    #allocation4 [shape = 's32[1]{0}', space=sflag, size = 0x4, scoped, tag = 'scoped memory for tpu_custom_call.1']
    #allocation5 [shape = 'u8[8192]{0}', space=vmem, size = 0x2000, scoped, tag = 'input window, operand 1, single buffered']
    #allocation6 [shape = 's32[1]{0}', space=sflag, size = 0x4, scoped, tag = 'scoped memory for tpu_custom_call.1']
    #allocation7 [shape = 'u8[8192]{0}', space=vmem, size = 0x2000, scoped, tag = 'output window, operand 0, single buffered']
    #allocation8 [shape = 'u8[8192]{0}', space=vmem, size = 0x2000, scoped, tag = 'output window, operand 1, single buffered']
    #allocation9 [shape = 's32[1]{0}', space=sflag, size = 0x4, scoped, tag = 'scoped memory for tpu_custom_call.1']
    #allocation10 [shape = 'u8[8192]{0}', space=vmem, size = 0x2000, scoped, tag = 'output window, operand 2, single buffered']
    %10 = vsyncpa [#allocation3], 0
    %11 = vsyncpa [#allocation6], 0
    %12 = vsyncpa [#allocation4], 0
    %13 = vsyncpa [#allocation9], 0
    // Predicated region
    $region2: #{tpu_custom_call.1} parent=1 // pred_check
      _
    $region3: #{tpu_custom_call.1} parent=1 // pred_check_branch
      %15 = sbr.rel (0) target = $region5
    $region4: #{tpu_custom_call.1} parent=1 // pred_region
      %s16 = sadd.s32 0, 0
      %p17 = scmp.lt.s32.totalorder %s16, 0
      %s18 = scalar_select %p17, %s16, 0
      %s20 = ssub.s32 256, 256
      %21 = vsyncadd [#allocation3], %s20
      %s22 = smul.addr %s18, 128
      %s23 = scalar_lea.hbm %s0, %s22
      %s24 = sshll.u32 [#allocation2], 4
      %s25 = int_to_ptr.vmem [resolvable:$true] %s24
      %30 = dma.hbm_to_vmem [thread:$0]  %s23, 256, %s25, [#allocation3], 128, 128, 8
    $region5: #{tpu_custom_call.1} parent=1 // pred_fallthru
      _
    // Predicated region
    $region6: #{tpu_custom_call.1} parent=1 // pred_check
      _
    $region7: #{tpu_custom_call.1} parent=1 // pred_check_branch
      %32 = sbr.rel (0) target = $region9
    $region8: #{tpu_custom_call.1} parent=1 // pred_region
      %s33 = sadd.s32 0, 0
      %p34 = scmp.lt.s32.totalorder %s33, 0
      %s35 = scalar_select %p34, %s33, 0
      %s37 = ssub.s32 256, 256
      %38 = vsyncadd [#allocation6], %s37
      %s39 = smul.addr %s35, 128
      %s40 = scalar_lea.hbm %s1, %s39
      %s41 = sshll.u32 [#allocation5], 4
      %s42 = int_to_ptr.vmem [resolvable:$true] %s41
      %47 = dma.hbm_to_vmem [thread:$0]  %s40, 256, %s42, [#allocation6], 128, 128, 8
    $region9: #{tpu_custom_call.1} parent=1 // pred_fallthru
      _
    // Predicated region
    $region10: #{tpu_custom_call.1} parent=1 // pred_check
      _
    $region11: #{tpu_custom_call.1} parent=1 // pred_check_branch
      %49 = sbr.rel (0) target = $region13
    $region12: #{tpu_custom_call.1} parent=1 // pred_region
      %50 = dma.done [#allocation3], 256
    $region13: #{tpu_custom_call.1} parent=1 // pred_fallthru
      _
    // Predicated region
    $region14: #{tpu_custom_call.1} parent=1 // pred_check
      _
    $region15: #{tpu_custom_call.1} parent=1 // pred_check_branch
      %52 = sbr.rel (0) target = $region17
    $region16: #{tpu_custom_call.1} parent=1 // pred_region
      %53 = dma.done [#allocation6], 256
    $region17: #{tpu_custom_call.1} parent=1 // pred_fallthru
      _
    %s54 = sadd.s32 0, 0
    %p55 = scmp.lt.s32.totalorder %s54, 0
    %s56 = scalar_select %p55, %s54, 0
    %s57 = sadd.s32 0, 0
    %p58 = scmp.lt.s32.totalorder %s57, 0
    %s59 = scalar_select %p58, %s57, 0
    %p60 = scmp.eq.s32.totalorder 0, 0
    // Predicated region
    $region18: #{tpu_custom_call.1} parent=1 // pred_check
      %p61 = pneg %p60
    $region19: #{tpu_custom_call.1} parent=1 // pred_check_branch
      %63 = sbr.rel (%p61) target = $region21
    $region20: #{tpu_custom_call.1} parent=1 // pred_region
      %64 = vst [vmem:[#allocation7] sm:$0xff] 0.0
      %65 = vst [vmem:[#allocation7 + $0x8] sm:$0xff] 0.0
      %66 = vst [vmem:[#allocation8] sm:$0xff] 0.0
      %67 = vst [vmem:[#allocation8 + $0x8] sm:$0xff] 0.0
      %68 = vst [vmem:[#allocation10] sm:$0xff] 0.0
      %69 = vst [vmem:[#allocation10 + $0x8] sm:$0xff] 0.0
    $region21: #{tpu_custom_call.1} parent=1 // pred_fallthru
      _
    %v70 = vld [vmem:[#allocation2] sm:$0xff]
    %v71 = vld [vmem:[#allocation2 + $0x8] sm:$0xff]
    %v72 = vld [vmem:[#allocation5] sm:$0xff]
    %v73 = vld [vmem:[#allocation5 + $0x8] sm:$0xff]
    %v74 = vand.u32 2147483647, %v70
    %v75 = vand.u32 2147483647, %v71
    %v76 = vsub.f32 0.0, %v74
    %v77 = vsub.f32 0.0, %v75
    %v78 = vmul.f32 %v76, 1.442695
    %v79 = vpow.pop %v78
    %v80 = vmul.f32 %v77, 1.442695
    %v81 = vpow.pop %v80
    %v82 = vmax.f32 %v70, 0.0
    %v83 = vmax.f32 %v71, 0.0
    %v84 = vmul.f32 %v70, %v72
    %v85 = vmul.f32 %v71, %v73
    %v86 = vsub.f32 %v82, %v84
    %v87 = vsub.f32 %v83, %v85
    %v88 = vadd.f32 %v79, 1.0
    %v89 = vlog2.pop %v88
    %v90 = vmul.f32 %v89, 0.6931472
    %v91 = vmul.f32 -0.5, %v79
    %v92 = vadd.f32 %v91, 1.0
    %v93 = vmul.f32 %v92, %v79
    %v94 = vand.u32 2147483647, %v79
    %vm95 = vcmp.lt.f32.partialorder %v94, 0.0004427343
    %v96 = vsel %vm95, %v93, %v90
    %v97 = vadd.f32 %v81, 1.0
    %v98 = vlog2.pop %v97
    %v99 = vmul.f32 %v98, 0.6931472
    %v100 = vmul.f32 -0.5, %v81
    %v101 = vadd.f32 %v100, 1.0
    %v102 = vmul.f32 %v101, %v81
    %v103 = vand.u32 2147483647, %v81
    %vm104 = vcmp.lt.f32.partialorder %v103, 0.0004427343
    %v105 = vsel %vm104, %v102, %v99
    %v106 = vadd.f32 %v86, %v96
    %v107 = vadd.f32 %v87, %v105
    %vm108 = vcmp.ge.f32.partialorder %v70, 0.0
    %vm109 = vcmp.ge.f32.partialorder %v71, 0.0
    %v110 = vsel %vm108, 1.0, %v79
    %v111 = vsel %vm109, 1.0, %v81
    %v112 = vadd.f32 %v79, 1.0
    %v113 = vadd.f32 %v81, 1.0
    %v114 = vrcp.pop %v112
    %v115 = vmul.f32 %v110, %v114
    %v116 = vrcp.pop %v113
    %v117 = vmul.f32 %v111, %v116
    %s118 = sadd.s32 0, 0
    %s119 = smul.u32 %s118, 8
    %s120 = sadd.s32 %s119, 8
    %p121 = scmp.gt.s32.totalorder %s120, 8
    %p122 = scmp.le.s32.totalorder %s120, 8
    // Predicated region
    $region22: #{tpu_custom_call.1} parent=1 // pred_check
      %p123 = pneg %p122
    $region23: #{tpu_custom_call.1} parent=1 // pred_check_branch
      %125 = sbr.rel (%p123) target = $region25
    $region24: #{tpu_custom_call.1} parent=1 // pred_region
      %v126 = vld [vmem:[#allocation7] sm:$0xff]
      %v127 = vld [vmem:[#allocation7 + $0x8] sm:$0xff]
      %v128 = vadd.f32 %v106, 0.0
      %v129 = vadd.f32 %v107, 0.0
      %v130 = vadd.f32 %v126, %v128
      %v131 = vadd.f32 %v127, %v129
      %132 = vst [vmem:[#allocation7] sm:$0xff] %v130
      %133 = vst [vmem:[#allocation7 + $0x8] sm:$0xff] %v131
      %v134 = vld [vmem:[#allocation8] sm:$0xff]
      %v135 = vld [vmem:[#allocation8 + $0x8] sm:$0xff]
      %v136 = vmul.f32 %v115, %v72
      %v137 = vmul.f32 %v117, %v73
      %v138 = vadd.f32 %v136, 0.0
      %v139 = vadd.f32 %v137, 0.0
      %v140 = vadd.f32 %v134, %v138
      %v141 = vadd.f32 %v135, %v139
      %142 = vst [vmem:[#allocation8] sm:$0xff] %v140
      %143 = vst [vmem:[#allocation8 + $0x8] sm:$0xff] %v141
      %v144 = vld [vmem:[#allocation10] sm:$0xff]
      %v145 = vld [vmem:[#allocation10 + $0x8] sm:$0xff]
      %v146 = vadd.f32 %v115, %v72
      %v147 = vadd.f32 %v117, %v73
      %v148 = vadd.f32 %v146, 0.0
      %v149 = vadd.f32 %v147, 0.0
      %v150 = vadd.f32 %v144, %v148
      %v151 = vadd.f32 %v145, %v149
      %152 = vst [vmem:[#allocation10] sm:$0xff] %v150
      %153 = vst [vmem:[#allocation10 + $0x8] sm:$0xff] %v151
    $region25: #{tpu_custom_call.1} parent=1 // pred_fallthru
      _
    // Predicated region
    $region26: #{tpu_custom_call.1} parent=1 // pred_check
      %p154 = pneg %p121
    $region27: #{tpu_custom_call.1} parent=1 // pred_check_branch
      %156 = sbr.rel (%p154) target = $region29
    $region28: #{tpu_custom_call.1} parent=1 // pred_region
      %v157 = vlaneseq
      %v158 = vshrl.u32 %v157, 7
      %v159 = vstv %s119
      %v160 = vadd.s32 %v158, %v159
      %vm161 = vcmp.lt.s32.totalorder %v160, 8
      %v162 = vsel %vm161, %v106, 0.0
      %v163 = vsel %vm161, %v107, 0.0
      %v164 = vsel %vm161, %v115, 0.0
      %v165 = vsel %vm161, %v117, 0.0
      %v166 = vsel %vm161, %v72, 0.0
      %v167 = vsel %vm161, %v73, 0.0
      %v168 = vld [vmem:[#allocation7] sm:$0xff]
      %v169 = vld [vmem:[#allocation7 + $0x8] sm:$0xff]
      %v170 = vadd.f32 %v162, 0.0
      %v171 = vadd.f32 %v163, 0.0
      %v172 = vadd.f32 %v168, %v170
      %v173 = vadd.f32 %v169, %v171
      %174 = vst [vmem:[#allocation7] sm:$0xff] %v172
      %175 = vst [vmem:[#allocation7 + $0x8] sm:$0xff] %v173
      %v176 = vld [vmem:[#allocation8] sm:$0xff]
      %v177 = vld [vmem:[#allocation8 + $0x8] sm:$0xff]
      %v178 = vmul.f32 %v164, %v166
      %v179 = vmul.f32 %v165, %v167
      %v180 = vadd.f32 %v178, 0.0
      %v181 = vadd.f32 %v179, 0.0
      %v182 = vadd.f32 %v176, %v180
      %v183 = vadd.f32 %v177, %v181
      %184 = vst [vmem:[#allocation8] sm:$0xff] %v182
      %185 = vst [vmem:[#allocation8 + $0x8] sm:$0xff] %v183
      %v186 = vld [vmem:[#allocation10] sm:$0xff]
      %v187 = vld [vmem:[#allocation10 + $0x8] sm:$0xff]
      %v188 = vadd.f32 %v164, %v166
      %v189 = vadd.f32 %v165, %v167
      %v190 = vadd.f32 %v188, 0.0
      %v191 = vadd.f32 %v189, 0.0
      %v192 = vadd.f32 %v186, %v190
      %v193 = vadd.f32 %v187, %v191
      %194 = vst [vmem:[#allocation10] sm:$0xff] %v192
      %195 = vst [vmem:[#allocation10 + $0x8] sm:$0xff] %v193
    $region29: #{tpu_custom_call.1} parent=1 // pred_fallthru
      _
    // Predicated region
    $region30: #{tpu_custom_call.1} parent=1 // pred_check
      _
    $region31: #{tpu_custom_call.1} parent=1 // pred_check_branch
      %197 = sbr.rel (0) target = $region33
    $region32: #{tpu_custom_call.1} parent=1 // pred_region
      %s199 = ssub.s32 256, 256
      %200 = vsyncadd [#allocation4], %s199
      %s201 = sshll.u32 [#allocation7], 4
      %s202 = int_to_ptr.vmem [resolvable:$true] %s201
      %207 = dma.vmem_to_hbm [thread:$0]  %s202, 256, %s2, [#allocation4], 128, 128, 8
    $region33: #{tpu_custom_call.1} parent=1 // pred_fallthru
      _
    // Predicated region
    $region34: #{tpu_custom_call.1} parent=1 // pred_check
      _
    $region35: #{tpu_custom_call.1} parent=1 // pred_check_branch
      %209 = sbr.rel (0) target = $region37
    $region36: #{tpu_custom_call.1} parent=1 // pred_region
      %s211 = ssub.s32 256, 256
      %212 = vsyncadd [#allocation9], %s211
      %s213 = sshll.u32 [#allocation8], 4
      %s214 = int_to_ptr.vmem [resolvable:$true] %s213
      %219 = dma.vmem_to_hbm [thread:$0]  %s214, 256, %s3, [#allocation9], 128, 128, 8
    $region37: #{tpu_custom_call.1} parent=1 // pred_fallthru
      _
    // Predicated region
    $region38: #{tpu_custom_call.1} parent=1 // pred_check
      _
    $region39: #{tpu_custom_call.1} parent=1 // pred_check_branch
      %221 = sbr.rel (0) target = $region41
    $region40: #{tpu_custom_call.1} parent=1 // pred_region
      %s223 = ssub.s32 256, 256
      %224 = vsyncadd [#allocation9], %s223
      %s225 = sshll.u32 [#allocation10], 4
      %s226 = int_to_ptr.vmem [resolvable:$true] %s225
      %231 = dma.vmem_to_hbm [thread:$0]  %s226, 256, %s4, [#allocation9], 128, 128, 8
    $region41: #{tpu_custom_call.1} parent=1 // pred_fallthru
      _
    // Predicated region
    $region42: #{tpu_custom_call.1} parent=1 // pred_check
      _
    $region43: #{tpu_custom_call.1} parent=1 // pred_check_branch
      %233 = sbr.rel (0) target = $region45
    $region44: #{tpu_custom_call.1} parent=1 // pred_region
      %234 = dma.done [#allocation4], 256
    $region45: #{tpu_custom_call.1} parent=1 // pred_fallthru
      _
    // Predicated region
    $region46: #{tpu_custom_call.1} parent=1 // pred_check
      _
    $region47: #{tpu_custom_call.1} parent=1 // pred_check_branch
      %236 = sbr.rel (0) target = $region49
    $region48: #{tpu_custom_call.1} parent=1 // pred_region
      %237 = dma.done [#allocation9], 256
    $region49: #{tpu_custom_call.1} parent=1 // pred_fallthru
      _
    // Predicated region
    $region50: #{tpu_custom_call.1} parent=1 // pred_check
      _
    $region51: #{tpu_custom_call.1} parent=1 // pred_check_branch
      %239 = sbr.rel (0) target = $region53
    $region52: #{tpu_custom_call.1} parent=1 // pred_region
      %240 = dma.done [#allocation9], 256
    $region53: #{tpu_custom_call.1} parent=1 // pred_fallthru
      _
    %241 = vsyncpa [#allocation3], 1
    %242 = vsyncpa [#allocation6], 1
    %243 = vsyncpa [#allocation4], 1
    %244 = vsyncpa [#allocation9], 1

</llo_original>
